<compile_context>
chip_gen: v5e
topology: v5e:2x2
jax: 0.10.0
libtpu: 0.0.40
codegen_flags: <defaults>
</compile_context>

<pallas_src>
import jax
import jax.numpy as jnp
from jax.experimental import pallas as pl
from jax.experimental.pallas import tpu as pltpu

EPS = 1e-5


# ----------------------------------------------------------------------------
# Kernels
# ----------------------------------------------------------------------------
def stn3d_feature_kernel(x_ref, w1_ref, t1_ref, w2_ref, t2_ref, w3_ref, t3_ref,
                         g_ref):
    """conv1..conv3 (+BN+ReLU) and running max over points.

    x_ref: (Bt, 3, TN) f32   w*: bf16 (BN scale folded)   t*: (1, C) f32 shift
    g_ref: (Bt, 1024) f32 output block, resident across the point-block axis.
    """
    n_idx = pl.program_id(1)

    @pl.when(n_idx == 0)
    def _():
        g_ref[...] = jnp.full(g_ref.shape, -jnp.inf, g_ref.dtype)

    x = x_ref[...]                              # (Bt, 3, TN) f32
    xt = jnp.transpose(x, (0, 2, 1))            # (Bt, TN, 3) — cheap 3-sublane xpose
    bt, tn, _ = xt.shape
    x2d = xt.reshape(bt * tn, 3).astype(jnp.bfloat16)   # (M, 3)

    # conv1 + bn1 + relu  -> (M, 64)
    h = jnp.dot(x2d, w1_ref[...], preferred_element_type=jnp.float32)
    h = jnp.maximum(h + t1_ref[...], 0.0)
    # conv2 + bn2 + relu  -> (M, 128)
    h = jnp.dot(h.astype(jnp.bfloat16), w2_ref[...],
                preferred_element_type=jnp.float32)
    h = jnp.maximum(h + t2_ref[...], 0.0)
    # conv3 + bn3 + relu  -> (M, 1024)
    h = jnp.dot(h.astype(jnp.bfloat16), w3_ref[...],
                preferred_element_type=jnp.float32)
    h = jnp.maximum(h + t3_ref[...], 0.0)

    # per-batch max over this block of points, folded into the running max
    blk_max = jnp.max(h.reshape(bt, tn, 1024), axis=1)   # (Bt, 1024)
    g_ref[...] = jnp.maximum(g_ref[...], blk_max)


def stn3d_head_kernel(g_ref, fw1_ref, ft1_ref, fw2_ref, ft2_ref, fw3_ref,
                      fb3_ref, o_ref):
    """fc1/fc2/fc3 on the pooled features, batched over the whole batch."""
    g = g_ref[...].astype(jnp.bfloat16)                       # (Bp, 1024)
    f = jnp.dot(g, fw1_ref[...], preferred_element_type=jnp.float32)
    f = jnp.maximum(f + ft1_ref[...], 0.0)                    # (Bp, 512)
    f = jnp.dot(f.astype(jnp.bfloat16), fw2_ref[...],
                preferred_element_type=jnp.float32)
    f = jnp.maximum(f + ft2_ref[...], 0.0)                    # (Bp, 256)
    o = jnp.dot(f.astype(jnp.bfloat16), fw3_ref[...],
                preferred_element_type=jnp.float32)
    o_ref[...] = o + fb3_ref[...]                             # (Bp, 9), identity folded


# ----------------------------------------------------------------------------
# Parameter folding (eval-mode BN -> weight column scale + shift)
# ----------------------------------------------------------------------------
def _fold_layer(w, b, bn):
    gamma, beta, mean, var = bn
    scale = gamma / jnp.sqrt(var + EPS)
    w_scaled = (w * scale[None, :]).astype(jnp.bfloat16)          # scale folded into W
    shift = (b * scale + beta - mean * scale).reshape(1, -1).astype(jnp.float32)
    return w_scaled, shift


def _fold_all(p):
    w1, t1 = _fold_layer(p["w1"], p["b1"], p["bn1"])
    w2, t2 = _fold_layer(p["w2"], p["b2"], p["bn2"])
    w3, t3 = _fold_layer(p["w3"], p["b3"], p["bn3"])
    fw1, ft1 = _fold_layer(p["fw1"], p["fb1"], p["bn4"])
    fw2, ft2 = _fold_layer(p["fw2"], p["fb2"], p["bn5"])
    iden = jnp.array([1, 0, 0, 0, 1, 0, 0, 0, 1], jnp.float32)
    fw3 = p["fw3"].astype(jnp.bfloat16)
    fb3 = (p["fb3"] + iden).reshape(1, 9).astype(jnp.float32)     # fold "x + iden"
    return (w1, t1, w2, t2, w3, t3, fw1, ft1, fw2, ft2, fw3, fb3)


# ----------------------------------------------------------------------------
# Wrapper
# ----------------------------------------------------------------------------
def stn3d_forward(x_ncl, params):
    """x_ncl: (B, 3, N) float32, exactly like the PyTorch module input."""
    B, C, N = x_ncl.shape
    assert C == 3
    x_p = x_ncl.astype(jnp.float32)

    (w1, t1, w2, t2, w3, t3, fw1, ft1, fw2, ft2, fw3, fb3) = _fold_all(params)

    # ---- pad the point dim (repeat a real point -> max unchanged) ----
    TN_CAP = 256
    if N <= TN_CAP:
        Np = max(8, pl.cdiv(N, 8) * 8)
        TN = Np
    else:
        Np = pl.cdiv(N, TN_CAP) * TN_CAP
        TN = TN_CAP
    if Np != N:
        pad = jnp.broadcast_to(x_p[:, :, :1], (B, 3, Np - N))
        x_p = jnp.concatenate([x_p, pad], axis=2)

    # ---- pad the batch dim (zeros; padded rows discarded at the end) ----
    BT_CAP = 8
    Bt = min(BT_CAP, B)
    Bp = pl.cdiv(B, Bt) * Bt
    if Bp != B:
        x_p = jnp.concatenate(
            [x_p, jnp.zeros((Bp - B, 3, Np), jnp.float32)], axis=0)

    # ---------------- feature kernel: conv stack + max pool ----------------
    grid = (Bp // Bt, Np // TN)

    def const_spec(arr):
        nd = arr.ndim
        return pl.BlockSpec(arr.shape, lambda b, n, _nd=nd: (0,) * _nd)

    feat_consts = (w1, t1, w2, t2, w3, t3)
    g = pl.pallas_call(
        stn3d_feature_kernel,
        out_shape=jax.ShapeDtypeStruct((Bp, 1024), jnp.float32),
        grid=grid,
        in_specs=[pl.BlockSpec((Bt, 3, TN), lambda b, n: (b, 0, n))]
                 + [const_spec(a) for a in feat_consts],
        out_specs=pl.BlockSpec((Bt, 1024), lambda b, n: (b, 0)),
        compiler_params=pltpu.CompilerParams(
            dimension_semantics=("parallel", "arbitrary"),
            vmem_limit_bytes=48 << 20,   # fits v7x's 64 MiB with headroom
        ),
    )(x_p, *feat_consts)

    # ---------------- head kernel: fc1/fc2/fc3, batched over B ----------------
    head_args = (g, fw1, ft1, fw2, ft2, fw3, fb3)

    def head_spec(arr):
        nd = arr.ndim
        return pl.BlockSpec(arr.shape, lambda i, _nd=nd: (0,) * _nd)

    o = pl.pallas_call(
        stn3d_head_kernel,
        out_shape=jax.ShapeDtypeStruct((Bp, 9), jnp.float32),
        grid=(1,),
        in_specs=[head_spec(a) for a in head_args],
        out_specs=pl.BlockSpec((Bp, 9), lambda i: (0, 0)),
        compiler_params=pltpu.CompilerParams(
            dimension_semantics=("arbitrary",),
        ),
    )(*head_args)

    return o[:B].reshape(B, 3, 3)


# ----------------------------------------------------------------------------
# Parameter init + references
# ----------------------------------------------------------------------------
def init_params(key):
    ks = jax.random.split(key, 40)
    i = 0

    def nxt():
        nonlocal i
        k = ks[i]
        i += 1
        return k

    def dense(cin, cout, scale=0.1):
        return jax.random.normal(nxt(), (cin, cout), jnp.float32) * scale

    def bn(c):
        gamma = 1.0 + 0.1 * jax.random.normal(nxt(), (c,), jnp.float32)
        beta = 0.1 * jax.random.normal(nxt(), (c,), jnp.float32)
        mean = 0.1 * jax.random.normal(nxt(), (c,), jnp.float32)
        var = jax.random.uniform(nxt(), (c,), jnp.float32, 0.5, 1.5)
        return gamma, beta, mean, var

    p = {}
    p["w1"], p["b1"], p["bn1"] = dense(3, 64), 0.05 * jax.random.normal(nxt(), (64,)), bn(64)
    p["w2"], p["b2"], p["bn2"] = dense(64, 128), 0.05 * jax.random.normal(nxt(), (128,)), bn(128)
    p["w3"], p["b3"], p["bn3"] = dense(128, 1024), 0.05 * jax.random.normal(nxt(), (1024,)), bn(1024)
    p["fw1"], p["fb1"], p["bn4"] = dense(1024, 512, 0.03), 0.05 * jax.random.normal(nxt(), (512,)), bn(512)
    p["fw2"], p["fb2"], p["bn5"] = dense(512, 256, 0.03), 0.05 * jax.random.normal(nxt(), (256,)), bn(256)
    p["fw3"], p["fb3"] = dense(256, 9, 0.03), 0.05 * jax.random.normal(nxt(), (9,))
    return p


def stn3d_reference_f32(x_ncl, p):
    """Pure-f32 plain-JAX mirror of the PyTorch forward (eval-mode BN)."""
    x = jnp.transpose(x_ncl, (0, 2, 1)).astype(jnp.float32)   # (B, N, 3)

    def layer(h, w, b, bn):
        gamma, beta, mean, var = bn
        h = h @ w + b
        h = (h - mean) / jnp.sqrt(var + EPS) * gamma + beta
        return jnp.maximum(h, 0.0)

    h = layer(x, p["w1"], p["b1"], p["bn1"])
    h = layer(h, p["w2"], p["b2"], p["bn2"])
    h = layer(h, p["w3"], p["b3"], p["bn3"])
    g = jnp.max(h, axis=1)
    f = layer(g, p["fw1"], p["fb1"], p["bn4"])
    f = layer(f, p["fw2"], p["fb2"], p["bn5"])
    o = f @ p["fw3"] + p["fb3"]
    iden = jnp.array([1, 0, 0, 0, 1, 0, 0, 0, 1], jnp.float32)
    return (o + iden).reshape(-1, 3, 3)


def stn3d_reference_bf16(x_ncl, p):
    """Plain-JAX reference using the same bf16-matmul / folded-BN recipe."""
    (w1, t1, w2, t2, w3, t3, fw1, ft1, fw2, ft2, fw3, fb3) = _fold_all(p)
    x = jnp.transpose(x_ncl, (0, 2, 1)).astype(jnp.float32)   # (B, N, 3)

    def mm(a, w):
        return jnp.dot(a.astype(jnp.bfloat16), w,
                       preferred_element_type=jnp.float32)

    h = jnp.maximum(mm(x, w1) + t1, 0.0)
    h = jnp.maximum(mm(h, w2) + t2, 0.0)
    h = jnp.maximum(mm(h, w3) + t3, 0.0)
    g = jnp.max(h, axis=1)
    f = jnp.maximum(mm(g, fw1) + ft1, 0.0)
    f = jnp.maximum(mm(f, fw2) + ft2, 0.0)
    o = mm(f, fw3) + fb3
    return o.reshape(-1, 3, 3)


if __name__ == "__main__":
    key = jax.random.PRNGKey(0)
    kp, kx = jax.random.split(key)
    params = init_params(kp)

    B, N = 2, 16
    x = jax.random.normal(kx, (B, 3, N), jnp.float32)   # PyTorch NCL input

    out = jax.block_until_ready(stn3d_forward(x, params))
    assert out.shape == (B, 3, 3)

    ref_bf16 = stn3d_reference_bf16(x, params)
    ref_f32 = stn3d_reference_f32(x, params)
    assert jnp.allclose(out, ref_bf16, atol=2e-2, rtol=2e-2), \
        "mismatch vs bf16-matched JAX reference"
    assert jnp.allclose(out, ref_f32, atol=1e-1, rtol=1e-1), \
        "mismatch vs f32 JAX reference"
    print("KERNEL_OK")
</pallas_src>

<mosaic_0001>
module attributes {stable_mosaic.version = 11 : i64} {
  func.func @stn3d_feature_kernel(%arg0: i32, %arg1: i32, %arg2: memref<2x3x16xf32, #tpu.memory_space<vmem>>, %arg3: memref<3x64xbf16, #tpu.memory_space<vmem>>, %arg4: memref<1x64xf32, #tpu.memory_space<vmem>>, %arg5: memref<64x128xbf16, #tpu.memory_space<vmem>>, %arg6: memref<1x128xf32, #tpu.memory_space<vmem>>, %arg7: memref<128x1024xbf16, #tpu.memory_space<vmem>>, %arg8: memref<1x1024xf32, #tpu.memory_space<vmem>>, %arg9: memref<2x1024xf32, #tpu.memory_space<vmem>>) attributes {dimension_semantics = [#tpu.dimension_semantics<parallel>, #tpu.dimension_semantics<arbitrary>], iteration_bounds = array<i64: 1, 1>, scalar_prefetch = 0 : i64, scratch_operands = 0 : i64, tpu.core_type = #tpu.core_type<tc>, window_params = [{transform_indices = @transform_0, window_bounds = array<i64: 2, 3, 16>}, {pipeline_mode = #tpu.pipeline_mode<synchronous>, transform_indices = @transform_1, window_bounds = array<i64: 3, 64>}, {pipeline_mode = #tpu.pipeline_mode<synchronous>, transform_indices = @transform_2, window_bounds = array<i64: 1, 64>}, {pipeline_mode = #tpu.pipeline_mode<synchronous>, transform_indices = @transform_3, window_bounds = array<i64: 64, 128>}, {pipeline_mode = #tpu.pipeline_mode<synchronous>, transform_indices = @transform_4, window_bounds = array<i64: 1, 128>}, {pipeline_mode = #tpu.pipeline_mode<synchronous>, transform_indices = @transform_5, window_bounds = array<i64: 128, 1024>}, {pipeline_mode = #tpu.pipeline_mode<synchronous>, transform_indices = @transform_6, window_bounds = array<i64: 1, 1024>}, {transform_indices = @transform_7, window_bounds = array<i64: 2, 1024>}]} {
    %c0_i32 = arith.constant 0 : i32
    %0 = arith.cmpi eq, %arg1, %c0_i32 : i32
    %1 = arith.extui %0 : i1 to i32
    %c0_i32_0 = arith.constant 0 : i32
    %2 = arith.cmpi ne, %1, %c0_i32_0 : i32
    scf.if %2 {
      %cst_25 = arith.constant 0xFF800000 : f32
      %35 = vector.broadcast %cst_25 : f32 to vector<2x1024xf32>
      %c0_26 = arith.constant 0 : index
      %c0_27 = arith.constant 0 : index
      %36 = vector.load %arg9[%c0_26, %c0_27] : memref<2x1024xf32, #tpu.memory_space<vmem>>, vector<2x1024xf32>
      tpu.vector_store %arg9[%c0_26, %c0_27], %35 {strides = array<i32>} : memref<2x1024xf32, #tpu.memory_space<vmem>>, vector<2x1024xf32>,
    } else {
    }
    %c0 = arith.constant 0 : index
    %c0_1 = arith.constant 0 : index
    %c0_2 = arith.constant 0 : index
    %3 = vector.load %arg2[%c0, %c0_1, %c0_2] : memref<2x3x16xf32, #tpu.memory_space<vmem>>, vector<2x3x16xf32>
    %4 = tpu.transpose %3, [0, 2, 1] : vector<2x3x16xf32> -> vector<2x16x3xf32>
    %5 = vector.shape_cast %4 : vector<2x16x3xf32> to vector<32x3xf32>
    %6 = arith.truncf %5 : vector<32x3xf32> to vector<32x3xbf16>
    %c0_3 = arith.constant 0 : index
    %c0_4 = arith.constant 0 : index
    %7 = vector.load %arg3[%c0_3, %c0_4] : memref<3x64xbf16, #tpu.memory_space<vmem>>, vector<3x64xbf16>
    %cst = arith.constant dense<0.000000e+00> : vector<32x64xf32>
    %8 = tpu.matmul %6, %7, %cst {dimension_numbers = #tpu.dot_dimension_numbers<[1], [0], [0], [1], [0, 0, 1, 1], [], []>} : vector<32x3xbf16>, vector<3x64xbf16>, vector<32x64xf32> -> vector<32x64xf32>
    %c0_5 = arith.constant 0 : index
    %c0_6 = arith.constant 0 : index
    %9 = vector.load %arg4[%c0_5, %c0_6] : memref<1x64xf32, #tpu.memory_space<vmem>>, vector<1x64xf32>
    %10 = vector.broadcast %9 : vector<1x64xf32> to vector<32x64xf32>
    %11 = arith.addf %8, %10 : vector<32x64xf32>
    %cst_7 = arith.constant 0.000000e+00 : f32
    %12 = vector.broadcast %cst_7 : f32 to vector<32x64xf32>
    %13 = arith.maximumf %11, %12 : vector<32x64xf32>
    %14 = arith.truncf %13 : vector<32x64xf32> to vector<32x64xbf16>
    %c0_8 = arith.constant 0 : index
    %c0_9 = arith.constant 0 : index
    %15 = vector.load %arg5[%c0_8, %c0_9] : memref<64x128xbf16, #tpu.memory_space<vmem>>, vector<64x128xbf16>
    %cst_10 = arith.constant dense<0.000000e+00> : vector<32x128xf32>
    %16 = tpu.matmul %14, %15, %cst_10 {dimension_numbers = #tpu.dot_dimension_numbers<[1], [0], [0], [1], [0, 0, 1, 1], [], []>} : vector<32x64xbf16>, vector<64x128xbf16>, vector<32x128xf32> -> vector<32x128xf32>
    %c0_11 = arith.constant 0 : index
    %c0_12 = arith.constant 0 : index
    %17 = vector.load %arg6[%c0_11, %c0_12] : memref<1x128xf32, #tpu.memory_space<vmem>>, vector<1x128xf32>
    %18 = vector.broadcast %17 : vector<1x128xf32> to vector<32x128xf32>
    %19 = arith.addf %16, %18 : vector<32x128xf32>
    %cst_13 = arith.constant 0.000000e+00 : f32
    %20 = vector.broadcast %cst_13 : f32 to vector<32x128xf32>
    %21 = arith.maximumf %19, %20 : vector<32x128xf32>
    %22 = arith.truncf %21 : vector<32x128xf32> to vector<32x128xbf16>
    %c0_14 = arith.constant 0 : index
    %c0_15 = arith.constant 0 : index
    %23 = vector.load %arg7[%c0_14, %c0_15] : memref<128x1024xbf16, #tpu.memory_space<vmem>>, vector<128x1024xbf16>
    %cst_16 = arith.constant dense<0.000000e+00> : vector<32x1024xf32>
    %24 = tpu.matmul %22, %23, %cst_16 {dimension_numbers = #tpu.dot_dimension_numbers<[1], [0], [0], [1], [0, 0, 1, 1], [], []>} : vector<32x128xbf16>, vector<128x1024xbf16>, vector<32x1024xf32> -> vector<32x1024xf32>
    %c0_17 = arith.constant 0 : index
    %c0_18 = arith.constant 0 : index
    %25 = vector.load %arg8[%c0_17, %c0_18] : memref<1x1024xf32, #tpu.memory_space<vmem>>, vector<1x1024xf32>
    %26 = vector.broadcast %25 : vector<1x1024xf32> to vector<32x1024xf32>
    %27 = arith.addf %24, %26 : vector<32x1024xf32>
    %cst_19 = arith.constant 0.000000e+00 : f32
    %28 = vector.broadcast %cst_19 : f32 to vector<32x1024xf32>
    %29 = arith.maximumf %27, %28 : vector<32x1024xf32>
    %30 = vector.shape_cast %29 : vector<32x1024xf32> to vector<2x16x1024xf32>
    %cst_20 = arith.constant dense<0xFF800000> : vector<2x1024xf32>
    %31 = vector.multi_reduction <maximumf>, %30, %cst_20 [1] : vector<2x16x1024xf32> to vector<2x1024xf32>
    %c0_21 = arith.constant 0 : index
    %c0_22 = arith.constant 0 : index
    %32 = vector.load %arg9[%c0_21, %c0_22] : memref<2x1024xf32, #tpu.memory_space<vmem>>, vector<2x1024xf32>
    %33 = arith.maximumf %32, %31 : vector<2x1024xf32>
    %c0_23 = arith.constant 0 : index
    %c0_24 = arith.constant 0 : index
    %34 = vector.load %arg9[%c0_23, %c0_24] : memref<2x1024xf32, #tpu.memory_space<vmem>>, vector<2x1024xf32>
    tpu.vector_store %arg9[%c0_23, %c0_24], %33 {strides = array<i32>} : memref<2x1024xf32, #tpu.memory_space<vmem>>, vector<2x1024xf32>,
    return
  }
  func.func @transform_0(%arg0: i32, %arg1: i32) -> (i32, i32, i32) {
    %c0_i32 = arith.constant 0 : i32
    %c0_i32_0 = arith.constant 0 : i32
    return %arg0, %c0_i32, %arg1 : i32, i32, i32
  }
  func.func @transform_1(%arg0: i32, %arg1: i32) -> (i32, i32) {
    %c0_i32 = arith.constant 0 : i32
    %c0_i32_0 = arith.constant 0 : i32
    %c0_i32_1 = arith.constant 0 : i32
    return %c0_i32, %c0_i32_0 : i32, i32
  }
  func.func @transform_2(%arg0: i32, %arg1: i32) -> (i32, i32) {
    %c0_i32 = arith.constant 0 : i32
    %c0_i32_0 = arith.constant 0 : i32
    %c0_i32_1 = arith.constant 0 : i32
    return %c0_i32, %c0_i32_0 : i32, i32
  }
  func.func @transform_3(%arg0: i32, %arg1: i32) -> (i32, i32) {
    %c0_i32 = arith.constant 0 : i32
    %c0_i32_0 = arith.constant 0 : i32
    %c0_i32_1 = arith.constant 0 : i32
    return %c0_i32, %c0_i32_0 : i32, i32
  }
  func.func @transform_4(%arg0: i32, %arg1: i32) -> (i32, i32) {
    %c0_i32 = arith.constant 0 : i32
    %c0_i32_0 = arith.constant 0 : i32
    %c0_i32_1 = arith.constant 0 : i32
    return %c0_i32, %c0_i32_0 : i32, i32
  }
  func.func @transform_5(%arg0: i32, %arg1: i32) -> (i32, i32) {
    %c0_i32 = arith.constant 0 : i32
    %c0_i32_0 = arith.constant 0 : i32
    %c0_i32_1 = arith.constant 0 : i32
    return %c0_i32, %c0_i32_0 : i32, i32
  }
  func.func @transform_6(%arg0: i32, %arg1: i32) -> (i32, i32) {
    %c0_i32 = arith.constant 0 : i32
    %c0_i32_0 = arith.constant 0 : i32
    %c0_i32_1 = arith.constant 0 : i32
    return %c0_i32, %c0_i32_0 : i32, i32
  }
  func.func @transform_7(%arg0: i32, %arg1: i32) -> (i32, i32) {
    %c0_i32 = arith.constant 0 : i32
    %c0_i32_0 = arith.constant 0 : i32
    return %arg0, %c0_i32 : i32, i32
  }
}

</mosaic_0001>

<llo_original>
// kernel: tpu_custom_call.1
$region0: #{tpu_custom_call.1}
  #allocation0 [shape = 'u32[]', space=smem, size = 0x4, offset = 0x4, fixed_abs, tag = 'smem constant byte address 0x4 - core index']
  #allocation1 [shape = 'u32[72,128]{1,0:T(1,128)}', space=vmem, size = 0x9000, scoped, tag = 'internal scratch']
  %s0 = inlined_call_operand.vmem [shape: f32[2,3,16], index: 0, kind: input, shape index: {}]
  %s1 = inlined_call_operand.vmem [shape: bf16[3,64], index: 1, kind: input, shape index: {}]
  %s2 = inlined_call_operand.vmem [shape: f32[1,64], index: 2, kind: input, shape index: {}]
  %s3 = inlined_call_operand.hbm [shape: bf16[64,128], index: 3, kind: input, shape index: {}]
  %s4 = inlined_call_operand.vmem [shape: f32[1,128], index: 4, kind: input, shape index: {}]
  %s5 = inlined_call_operand.hbm [shape: bf16[128,1024], index: 5, kind: input, shape index: {}]
  %s6 = inlined_call_operand.vmem [shape: f32[1,1024], index: 6, kind: input, shape index: {}]
  %s7 = inlined_call_operand.hbm [shape: f32[2,1024], index: 7, kind: output, shape index: {}]
  %s8 = sld [smem:[#allocation0]]
  $region50: #{tpu_custom_call.1} parent=0
    _
  %s10 = ssub.s32 1, %s8
  %s11 = scalar_select 0, %s10, %s8
  $region1: #{tpu_custom_call.1} parent=0
    #allocation2 [shape = 'u8[16384]{0}', space=vmem, size = 0x4000, scoped, tag = 'input window, operand 3, single buffered']
    #allocation3 [shape = 's32[1]{0}', space=sflag, size = 0x4, scoped, tag = 'scoped memory for tpu_custom_call.1']
    #allocation4 [shape = 's32[1]{0}', space=sflag, size = 0x4, scoped, tag = 'scoped memory for tpu_custom_call.1']
    #allocation5 [shape = 'u8[262144]{0}', space=vmem, size = 0x40000, scoped, tag = 'input window, operand 5, single buffered']
    #allocation6 [shape = 's32[1]{0}', space=sflag, size = 0x4, scoped, tag = 'scoped memory for tpu_custom_call.1']
    #allocation7 [shape = 'u8[8192]{0}', space=vmem, size = 0x2000, scoped, tag = 'output window, operand 0, single buffered']
    %12 = vsyncpa [#allocation3], 0
    %13 = vsyncpa [#allocation6], 0
    %14 = vsyncpa [#allocation4], 0
    // Predicated region
    $region2: #{tpu_custom_call.1} parent=1 // pred_check
      _
    $region3: #{tpu_custom_call.1} parent=1 // pred_check_branch
      %16 = sbr.rel (0) target = $region5
    $region4: #{tpu_custom_call.1} parent=1 // pred_region
      _
    $region5: #{tpu_custom_call.1} parent=1 // pred_fallthru
      _
    // Predicated region
    $region6: #{tpu_custom_call.1} parent=1 // pred_check
      _
    $region7: #{tpu_custom_call.1} parent=1 // pred_check_branch
      %18 = sbr.rel (0) target = $region9
    $region8: #{tpu_custom_call.1} parent=1 // pred_region
      _
    $region9: #{tpu_custom_call.1} parent=1 // pred_fallthru
      _
    // Predicated region
    $region10: #{tpu_custom_call.1} parent=1 // pred_check
      _
    $region11: #{tpu_custom_call.1} parent=1 // pred_check_branch
      %20 = sbr.rel (0) target = $region13
    $region12: #{tpu_custom_call.1} parent=1 // pred_region
      _
    $region13: #{tpu_custom_call.1} parent=1 // pred_fallthru
      _
    // Predicated region
    $region14: #{tpu_custom_call.1} parent=1 // pred_check
      _
    $region15: #{tpu_custom_call.1} parent=1 // pred_check_branch
      %22 = sbr.rel (0) target = $region17
    $region16: #{tpu_custom_call.1} parent=1 // pred_region
      %24 = vsyncadd [#allocation3], 0
      %s25 = sshll.u32 %s3, 4
      %s26 = int_to_ptr.hbm [resolvable:$true] %s25
      %s27 = sshll.u32 [#allocation2], 4
      %s28 = int_to_ptr.vmem [resolvable:$true] %s27
      %33 = dma.hbm_to_vmem [thread:$0]  %s26, 512, %s28, [#allocation3], 64, 64, 4
    $region17: #{tpu_custom_call.1} parent=1 // pred_fallthru
      _
    // Predicated region
    $region18: #{tpu_custom_call.1} parent=1 // pred_check
      _
    $region19: #{tpu_custom_call.1} parent=1 // pred_check_branch
      %35 = sbr.rel (0) target = $region21
    $region20: #{tpu_custom_call.1} parent=1 // pred_region
      _
    $region21: #{tpu_custom_call.1} parent=1 // pred_fallthru
      _
    // Predicated region
    $region22: #{tpu_custom_call.1} parent=1 // pred_check
      _
    $region23: #{tpu_custom_call.1} parent=1 // pred_check_branch
      %37 = sbr.rel (0) target = $region25
    $region24: #{tpu_custom_call.1} parent=1 // pred_region
      %39 = vsyncadd [#allocation6], 0
      %s40 = sshll.u32 %s5, 4
      %s41 = int_to_ptr.hbm [resolvable:$true] %s40
      %s42 = sshll.u32 [#allocation5], 4
      %s43 = int_to_ptr.vmem [resolvable:$true] %s42
      %48 = dma.hbm_to_vmem [thread:$0]  %s41, 8192, %s43, [#allocation6], 512, 512, 32
    $region25: #{tpu_custom_call.1} parent=1 // pred_fallthru
      _
    // Predicated region
    $region26: #{tpu_custom_call.1} parent=1 // pred_check
      _
    $region27: #{tpu_custom_call.1} parent=1 // pred_check_branch
      %50 = sbr.rel (0) target = $region29
    $region28: #{tpu_custom_call.1} parent=1 // pred_region
      _
    $region29: #{tpu_custom_call.1} parent=1 // pred_fallthru
      _
    // Predicated region
    $region30: #{tpu_custom_call.1} parent=1 // pred_check
      _
    $region31: #{tpu_custom_call.1} parent=1 // pred_check_branch
      %52 = sbr.rel (0) target = $region33
    $region32: #{tpu_custom_call.1} parent=1 // pred_region
      %54 = dma.done [#allocation3], 512
    $region33: #{tpu_custom_call.1} parent=1 // pred_fallthru
      _
    // Predicated region
    $region34: #{tpu_custom_call.1} parent=1 // pred_check
      _
    $region35: #{tpu_custom_call.1} parent=1 // pred_check_branch
      %56 = sbr.rel (0) target = $region37
    $region36: #{tpu_custom_call.1} parent=1 // pred_region
      %58 = dma.done [#allocation6], 8192
    $region37: #{tpu_custom_call.1} parent=1 // pred_fallthru
      _
    %p60 = scmp.eq.s32.totalorder 0, 0
    // Predicated region
    $region38: #{tpu_custom_call.1} parent=1 // pred_check
      %p61 = pneg %p60
    $region39: #{tpu_custom_call.1} parent=1 // pred_check_branch
      %63 = sbr.rel (%p61) target = $region41
    $region40: #{tpu_custom_call.1} parent=1 // pred_region
      %64 = vst [vmem:[#allocation7] sm:$0xff] -inf
      %65 = vst [vmem:[#allocation7 + $0x8] sm:$0xff] -inf
    $region41: #{tpu_custom_call.1} parent=1 // pred_fallthru
      _
    %v66 = vld [vmem:[%s0] sm:$0x7]
    %v67 = vld [vmem:[%s0 + $0x4] sm:$0x7]
    %68 = vxpose.xlu0.b32.start [1/16] %v66, 128
    %69 = vxpose.xlu0.b32.cont [2/16] 0.0, 128
    %70 = vxpose.xlu0.b32.cont [3/16] 0.0, 128
    %71 = vxpose.xlu0.b32.cont [4/16] 0.0, 128
    %72 = vxpose.xlu0.b32.cont [5/16] 0.0, 128
    %73 = vxpose.xlu0.b32.cont [6/16] 0.0, 128
    %74 = vxpose.xlu0.b32.cont [7/16] 0.0, 128
    %75 = vxpose.xlu0.b32.cont [8/16] 0.0, 128
    %76 = vxpose.xlu0.b32.cont [9/16] 0.0, 128
    %77 = vxpose.xlu0.b32.cont [10/16] 0.0, 128
    %78 = vxpose.xlu0.b32.cont [11/16] 0.0, 128
    %79 = vxpose.xlu0.b32.cont [12/16] 0.0, 128
    %80 = vxpose.xlu0.b32.cont [13/16] 0.0, 128
    %81 = vxpose.xlu0.b32.cont [14/16] 0.0, 128
    %82 = vxpose.xlu0.b32.cont [15/16] 0.0, 128
    %83 = vxpose.xlu0.b32.end [16/16] 0.0, 128
    %v84 = vpop.trf.xlu0
    %v85 = vpop.trf.xlu0
    %v86 = vpop.trf.xlu0
    %v87 = vpop.trf.xlu0
    %v88 = vpop.trf.xlu0
    %v89 = vpop.trf.xlu0
    %v90 = vpop.trf.xlu0
    %v91 = vpop.trf.xlu0
    %v92 = vpop.trf.xlu0
    %v93 = vpop.trf.xlu0
    %v94 = vpop.trf.xlu0
    %v95 = vpop.trf.xlu0
    %v96 = vpop.trf.xlu0
    %v97 = vpop.trf.xlu0
    %v98 = vpop.trf.xlu0
    %v99 = vpop.trf.xlu0
    %100 = vxpose.xlu0.b32.start [1/16] %v67, 128
    %101 = vxpose.xlu0.b32.cont [2/16] 0.0, 128
    %102 = vxpose.xlu0.b32.cont [3/16] 0.0, 128
    %103 = vxpose.xlu0.b32.cont [4/16] 0.0, 128
    %104 = vxpose.xlu0.b32.cont [5/16] 0.0, 128
    %105 = vxpose.xlu0.b32.cont [6/16] 0.0, 128
    %106 = vxpose.xlu0.b32.cont [7/16] 0.0, 128
    %107 = vxpose.xlu0.b32.cont [8/16] 0.0, 128
    %108 = vxpose.xlu0.b32.cont [9/16] 0.0, 128
    %109 = vxpose.xlu0.b32.cont [10/16] 0.0, 128
    %110 = vxpose.xlu0.b32.cont [11/16] 0.0, 128
    %111 = vxpose.xlu0.b32.cont [12/16] 0.0, 128
    %112 = vxpose.xlu0.b32.cont [13/16] 0.0, 128
    %113 = vxpose.xlu0.b32.cont [14/16] 0.0, 128
    %114 = vxpose.xlu0.b32.cont [15/16] 0.0, 128
    %115 = vxpose.xlu0.b32.end [16/16] 0.0, 128
    %v116 = vpop.trf.xlu0
    %v117 = vpop.trf.xlu0
    %v118 = vpop.trf.xlu0
    %v119 = vpop.trf.xlu0
    %v120 = vpop.trf.xlu0
    %v121 = vpop.trf.xlu0
    %v122 = vpop.trf.xlu0
    %v123 = vpop.trf.xlu0
    %v124 = vpop.trf.xlu0
    %v125 = vpop.trf.xlu0
    %v126 = vpop.trf.xlu0
    %v127 = vpop.trf.xlu0
    %v128 = vpop.trf.xlu0
    %v129 = vpop.trf.xlu0
    %v130 = vpop.trf.xlu0
    %v131 = vpop.trf.xlu0
    %v132 = vpack.c.bf16 %v85, %v84
    %v133 = vpack.c.bf16 %v117, %v116
    %v134 = vld [vmem:[%s1] sm:$0x3]
    %v135 = vld [vmem:[%s2] sm:$0x1]
    %v137 = vperm.slane %v135, 0
    %vm139 = vcmask 23552
    %v141 = vsel %vm139, %v132, 0
    %v144 = vsel %vm139, %v133, 0
    %vm146 = vcmask 1040384
    %vm147 = vcmask 1041408
    %v148 = vsel %vm146, 4294967295, 65535
    %v149 = vsel %vm147, %v148, 0
    %v151 = vand.u32 %v134, %v149
    %153 = vmatpush.bf16.msra.mxu0 0
    %154 = vmatpush.bf16.msra.mxu0 0
    %155 = vmatpush.bf16.msra.mxu0 0
    %156 = vmatpush.bf16.msra.mxu0 0
    %157 = vmatpush.bf16.msra.mxu0 0
    %158 = vmatpush.bf16.msra.mxu0 0
    %159 = vmatpush.bf16.msra.mxu0 0
    %160 = vmatpush.bf16.msra.mxu0 %v151
    %161 = vmatmul.bf16.gmra.mxu0 %v141
    %v162 = vpop.f32.mrf.mxu0
    %v163 = vadd.f32 %v137, %v162
    %v164 = vpop.f32.mrf.mxu0
    %v165 = vadd.f32 %v137, %v164
    %166 = vmatmul.bf16.gmra.mxu0 %v144
    %v167 = vpop.f32.mrf.mxu0
    %v168 = vadd.f32 %v137, %v167
    %v169 = vpop.f32.mrf.mxu0
    %v170 = vadd.f32 %v137, %v169
    %171 = vdwg.mxu0
    %v172 = vmax.f32 %v163, 0.0
    %v173 = vmax.f32 %v165, 0.0
    %v174 = vmax.f32 %v168, 0.0
    %v175 = vmax.f32 %v170, 0.0
    %v176 = vpack.c.bf16 %v173, %v172
    %v177 = vpack.c.bf16 %v175, %v174
    %v178 = vld [vmem:[#allocation2] sm:$0xf]
    %v179 = vld [vmem:[#allocation2 + $0x4] sm:$0xf]
    %v180 = vld [vmem:[#allocation2 + $0x8] sm:$0xf]
    %v181 = vld [vmem:[#allocation2 + $0xc] sm:$0xf]
    %v182 = vld [vmem:[#allocation2 + $0x10] sm:$0xf]
    %v183 = vld [vmem:[#allocation2 + $0x14] sm:$0xf]
    %v184 = vld [vmem:[#allocation2 + $0x18] sm:$0xf]
    %v185 = vld [vmem:[#allocation2 + $0x1c] sm:$0xf]
    %v186 = vld [vmem:[%s4] sm:$0x1]
    %v188 = vperm.slane %v186, 0
    %v198 = vunpack.c.l.b16 %v178
    %v199 = vunpack.c.l.b16 %v179
    %v200 = vunpack.c.l.b16 %v180
    %v201 = vunpack.c.l.b16 %v181
    %v202 = vunpack.c.l.b16 %v182
    %v203 = vunpack.c.l.b16 %v183
    %v204 = vunpack.c.l.b16 %v184
    %v205 = vunpack.c.l.b16 %v185
    %v206 = vpack.c.b16 %v199, %v198
    %v207 = vpack.c.b16 %v201, %v200
    %v208 = vpack.c.b16 %v203, %v202
    %v209 = vpack.c.b16 %v205, %v204
    %vm214 = vcmask 523264
    %v216 = vsel %vm214, %v176, 0
    %v219 = vsel %vm214, %v177, 0
    %221 = vmatpush.bf16.msra.mxu0 0
    %222 = vmatpush.bf16.msra.mxu0 0
    %223 = vmatpush.bf16.msra.mxu0 0
    %224 = vmatpush.bf16.msra.mxu0 0
    %225 = vmatpush.bf16.msra.mxu0 %v209
    %226 = vmatpush.bf16.msra.mxu0 %v208
    %227 = vmatpush.bf16.msra.mxu0 %v207
    %228 = vmatpush.bf16.msra.mxu0 %v206
    %229 = vmatmul.bf16.gmra.mxu0 %v216
    %v230 = vpop.f32.mrf.mxu0
    %v231 = vadd.f32 %v188, %v230
    %v232 = vpop.f32.mrf.mxu0
    %v233 = vadd.f32 %v188, %v232
    %234 = vmatmul.bf16.gmra.mxu0 %v219
    %v235 = vpop.f32.mrf.mxu0
    %v236 = vadd.f32 %v188, %v235
    %v237 = vpop.f32.mrf.mxu0
    %v238 = vadd.f32 %v188, %v237
    %239 = vdwg.mxu0
    %v240 = vmax.f32 %v231, 0.0
    %v241 = vmax.f32 %v233, 0.0
    %v242 = vmax.f32 %v236, 0.0
    %v243 = vmax.f32 %v238, 0.0
    %v244 = vpack.c.bf16 %v241, %v240
    %v245 = vpack.c.bf16 %v243, %v242
    %v246 = vld [vmem:[#allocation5] sm:$0xff]
    %v247 = vld [vmem:[#allocation5 + $0x8] sm:$0xff]
    %v248 = vld [vmem:[#allocation5 + $0x10] sm:$0xff]
    %v249 = vld [vmem:[#allocation5 + $0x18] sm:$0xff]
    %v250 = vld [vmem:[#allocation5 + $0x20] sm:$0xff]
    %v251 = vld [vmem:[#allocation5 + $0x28] sm:$0xff]
    %v252 = vld [vmem:[#allocation5 + $0x30] sm:$0xff]
    %v253 = vld [vmem:[#allocation5 + $0x38] sm:$0xff]
    %v254 = vld [vmem:[#allocation5 + $0x40] sm:$0xff]
    %v255 = vld [vmem:[#allocation5 + $0x48] sm:$0xff]
    %v256 = vld [vmem:[#allocation5 + $0x50] sm:$0xff]
    %v257 = vld [vmem:[#allocation5 + $0x58] sm:$0xff]
    %v258 = vld [vmem:[#allocation5 + $0x60] sm:$0xff]
    %v259 = vld [vmem:[#allocation5 + $0x68] sm:$0xff]
    %v260 = vld [vmem:[#allocation5 + $0x70] sm:$0xff]
    %v261 = vld [vmem:[#allocation5 + $0x78] sm:$0xff]
    %v262 = vld [vmem:[#allocation5 + $0x80] sm:$0xff]
    %v263 = vld [vmem:[#allocation5 + $0x88] sm:$0xff]
    %v264 = vld [vmem:[#allocation5 + $0x90] sm:$0xff]
    %v265 = vld [vmem:[#allocation5 + $0x98] sm:$0xff]
    %v266 = vld [vmem:[#allocation5 + $0xa0] sm:$0xff]
    %v267 = vld [vmem:[#allocation5 + $0xa8] sm:$0xff]
    %v268 = vld [vmem:[#allocation5 + $0xb0] sm:$0xff]
    %v269 = vld [vmem:[#allocation5 + $0xb8] sm:$0xff]
    %v270 = vld [vmem:[#allocation5 + $0xc0] sm:$0xff]
    %v271 = vld [vmem:[#allocation5 + $0xc8] sm:$0xff]
    %v272 = vld [vmem:[#allocation5 + $0xd0] sm:$0xff]
    %v273 = vld [vmem:[#allocation5 + $0xd8] sm:$0xff]
    %v274 = vld [vmem:[#allocation5 + $0xe0] sm:$0xff]
    %v275 = vld [vmem:[#allocation5 + $0xe8] sm:$0xff]
    %v276 = vld [vmem:[#allocation5 + $0xf0] sm:$0xff]
    %v277 = vld [vmem:[#allocation5 + $0xf8] sm:$0xff]
    %v278 = vld [vmem:[#allocation5 + $0x100] sm:$0xff]
    %v279 = vld [vmem:[#allocation5 + $0x108] sm:$0xff]
    %v280 = vld [vmem:[#allocation5 + $0x110] sm:$0xff]
    %v281 = vld [vmem:[#allocation5 + $0x118] sm:$0xff]
    %v282 = vld [vmem:[#allocation5 + $0x120] sm:$0xff]
    %v283 = vld [vmem:[#allocation5 + $0x128] sm:$0xff]
    %v284 = vld [vmem:[#allocation5 + $0x130] sm:$0xff]
    %v285 = vld [vmem:[#allocation5 + $0x138] sm:$0xff]
    %v286 = vld [vmem:[#allocation5 + $0x140] sm:$0xff]
    %v287 = vld [vmem:[#allocation5 + $0x148] sm:$0xff]
    %v288 = vld [vmem:[#allocation5 + $0x150] sm:$0xff]
    %v289 = vld [vmem:[#allocation5 + $0x158] sm:$0xff]
    %v290 = vld [vmem:[#allocation5 + $0x160] sm:$0xff]
    %v291 = vld [vmem:[#allocation5 + $0x168] sm:$0xff]
    %v292 = vld [vmem:[#allocation5 + $0x170] sm:$0xff]
    %v293 = vld [vmem:[#allocation5 + $0x178] sm:$0xff]
    %v294 = vld [vmem:[#allocation5 + $0x180] sm:$0xff]
    %v295 = vld [vmem:[#allocation5 + $0x188] sm:$0xff]
    %v296 = vld [vmem:[#allocation5 + $0x190] sm:$0xff]
    %v297 = vld [vmem:[#allocation5 + $0x198] sm:$0xff]
    %v298 = vld [vmem:[#allocation5 + $0x1a0] sm:$0xff]
    %v299 = vld [vmem:[#allocation5 + $0x1a8] sm:$0xff]
    %v300 = vld [vmem:[#allocation5 + $0x1b0] sm:$0xff]
    %v301 = vld [vmem:[#allocation5 + $0x1b8] sm:$0xff]
    %v302 = vld [vmem:[#allocation5 + $0x1c0] sm:$0xff]
    %v303 = vld [vmem:[#allocation5 + $0x1c8] sm:$0xff]
    %v304 = vld [vmem:[#allocation5 + $0x1d0] sm:$0xff]
    %v305 = vld [vmem:[#allocation5 + $0x1d8] sm:$0xff]
    %v306 = vld [vmem:[#allocation5 + $0x1e0] sm:$0xff]
    %v307 = vld [vmem:[#allocation5 + $0x1e8] sm:$0xff]
    %v308 = vld [vmem:[#allocation5 + $0x1f0] sm:$0xff]
    %v309 = vld [vmem:[#allocation5 + $0x1f8] sm:$0xff]
    %v310 = vld [vmem:[%s6] sm:$0xff]
    %v312 = vperm.slane %v310, 0
    %v313 = vperm.slane %v310, 1
    %v314 = vperm.slane %v310, 2
    %v315 = vperm.slane %v310, 3
    %v316 = vperm.slane %v310, 4
    %v317 = vperm.slane %v310, 5
    %v318 = vperm.slane %v310, 6
    %v319 = vperm.slane %v310, 7
    %v392 = vunpack.c.l.b16 %v246
    %v393 = vunpack.c.h.b16 %v246
    %v394 = vunpack.c.l.b16 %v247
    %v395 = vunpack.c.h.b16 %v247
    %v396 = vunpack.c.l.b16 %v248
    %v397 = vunpack.c.h.b16 %v248
    %v398 = vunpack.c.l.b16 %v249
    %v399 = vunpack.c.h.b16 %v249
    %v400 = vunpack.c.l.b16 %v250
    %v401 = vunpack.c.h.b16 %v250
    %v402 = vunpack.c.l.b16 %v251
    %v403 = vunpack.c.h.b16 %v251
    %v404 = vunpack.c.l.b16 %v252
    %v405 = vunpack.c.h.b16 %v252
    %v406 = vunpack.c.l.b16 %v253
    %v407 = vunpack.c.h.b16 %v253
    %v408 = vunpack.c.l.b16 %v254
    %v409 = vunpack.c.h.b16 %v254
    %v410 = vunpack.c.l.b16 %v255
    %v411 = vunpack.c.h.b16 %v255
    %v412 = vunpack.c.l.b16 %v256
    %v413 = vunpack.c.h.b16 %v256
    %v414 = vunpack.c.l.b16 %v257
    %v415 = vunpack.c.h.b16 %v257
    %v416 = vunpack.c.l.b16 %v258
    %v417 = vunpack.c.h.b16 %v258
    %v418 = vunpack.c.l.b16 %v259
    %v419 = vunpack.c.h.b16 %v259
    %v420 = vunpack.c.l.b16 %v260
    %v421 = vunpack.c.h.b16 %v260
    %v422 = vunpack.c.l.b16 %v261
    %v423 = vunpack.c.h.b16 %v261
    %v424 = vunpack.c.l.b16 %v262
    %v425 = vunpack.c.h.b16 %v262
    %v426 = vunpack.c.l.b16 %v263
    %v427 = vunpack.c.h.b16 %v263
    %v428 = vunpack.c.l.b16 %v264
    %v429 = vunpack.c.h.b16 %v264
    %v430 = vunpack.c.l.b16 %v265
    %v431 = vunpack.c.h.b16 %v265
    %v432 = vunpack.c.l.b16 %v266
    %v433 = vunpack.c.h.b16 %v266
    %v434 = vunpack.c.l.b16 %v267
    %v435 = vunpack.c.h.b16 %v267
    %v436 = vunpack.c.l.b16 %v268
    %v437 = vunpack.c.h.b16 %v268
    %v438 = vunpack.c.l.b16 %v269
    %v439 = vunpack.c.h.b16 %v269
    %v440 = vunpack.c.l.b16 %v270
    %v441 = vunpack.c.h.b16 %v270
    %v442 = vunpack.c.l.b16 %v271
    %v443 = vunpack.c.h.b16 %v271
    %v444 = vunpack.c.l.b16 %v272
    %v445 = vunpack.c.h.b16 %v272
    %v446 = vunpack.c.l.b16 %v273
    %v447 = vunpack.c.h.b16 %v273
    %v448 = vunpack.c.l.b16 %v274
    %v449 = vunpack.c.h.b16 %v274
    %v450 = vunpack.c.l.b16 %v275
    %v451 = vunpack.c.h.b16 %v275
    %v452 = vunpack.c.l.b16 %v276
    %v453 = vunpack.c.h.b16 %v276
    %v454 = vunpack.c.l.b16 %v277
    %v455 = vunpack.c.h.b16 %v277
    %v456 = vunpack.c.l.b16 %v278
    %v457 = vunpack.c.h.b16 %v278
    %v458 = vunpack.c.l.b16 %v279
    %v459 = vunpack.c.h.b16 %v279
    %v460 = vunpack.c.l.b16 %v280
    %v461 = vunpack.c.h.b16 %v280
    %v462 = vunpack.c.l.b16 %v281
    %v463 = vunpack.c.h.b16 %v281
    %v464 = vunpack.c.l.b16 %v282
    %v465 = vunpack.c.h.b16 %v282
    %v466 = vunpack.c.l.b16 %v283
    %v467 = vunpack.c.h.b16 %v283
    %v468 = vunpack.c.l.b16 %v284
    %v469 = vunpack.c.h.b16 %v284
    %v470 = vunpack.c.l.b16 %v285
    %v471 = vunpack.c.h.b16 %v285
    %v472 = vunpack.c.l.b16 %v286
    %v473 = vunpack.c.h.b16 %v286
    %v474 = vunpack.c.l.b16 %v287
    %v475 = vunpack.c.h.b16 %v287
    %v476 = vunpack.c.l.b16 %v288
    %v477 = vunpack.c.h.b16 %v288
    %v478 = vunpack.c.l.b16 %v289
    %v479 = vunpack.c.h.b16 %v289
    %v480 = vunpack.c.l.b16 %v290
    %v481 = vunpack.c.h.b16 %v290
    %v482 = vunpack.c.l.b16 %v291
    %v483 = vunpack.c.h.b16 %v291
    %v484 = vunpack.c.l.b16 %v292
    %v485 = vunpack.c.h.b16 %v292
    %v486 = vunpack.c.l.b16 %v293
    %v487 = vunpack.c.h.b16 %v293
    %v488 = vunpack.c.l.b16 %v294
    %v489 = vunpack.c.h.b16 %v294
    %v490 = vunpack.c.l.b16 %v295
    %v491 = vunpack.c.h.b16 %v295
    %v492 = vunpack.c.l.b16 %v296
    %v493 = vunpack.c.h.b16 %v296
    %v494 = vunpack.c.l.b16 %v297
    %v495 = vunpack.c.h.b16 %v297
    %v496 = vunpack.c.l.b16 %v298
    %v497 = vunpack.c.h.b16 %v298
    %v498 = vunpack.c.l.b16 %v299
    %v499 = vunpack.c.h.b16 %v299
    %v500 = vunpack.c.l.b16 %v300
    %v501 = vunpack.c.h.b16 %v300
    %v502 = vunpack.c.l.b16 %v301
    %v503 = vunpack.c.h.b16 %v301
    %v504 = vunpack.c.l.b16 %v302
    %v505 = vunpack.c.h.b16 %v302
    %v506 = vunpack.c.l.b16 %v303
    %v507 = vunpack.c.h.b16 %v303
    %v508 = vunpack.c.l.b16 %v304
    %v509 = vunpack.c.h.b16 %v304
    %v510 = vunpack.c.l.b16 %v305
    %v511 = vunpack.c.h.b16 %v305
    %v512 = vunpack.c.l.b16 %v306
    %v513 = vunpack.c.h.b16 %v306
    %v514 = vunpack.c.l.b16 %v307
    %v515 = vunpack.c.h.b16 %v307
    %v516 = vunpack.c.l.b16 %v308
    %v517 = vunpack.c.h.b16 %v308
    %v518 = vunpack.c.l.b16 %v309
    %v519 = vunpack.c.h.b16 %v309
    %v520 = vpack.c.b16 %v400, %v392
    %v521 = vpack.c.b16 %v401, %v393
    %v522 = vpack.c.b16 %v402, %v394
    %v523 = vpack.c.b16 %v403, %v395
    %v524 = vpack.c.b16 %v404, %v396
    %v525 = vpack.c.b16 %v405, %v397
    %v526 = vpack.c.b16 %v406, %v398
    %v527 = vpack.c.b16 %v407, %v399
    %v528 = vpack.c.b16 %v416, %v408
    %v529 = vpack.c.b16 %v417, %v409
    %v530 = vpack.c.b16 %v418, %v410
    %v531 = vpack.c.b16 %v419, %v411
    %v532 = vpack.c.b16 %v420, %v412
    %v533 = vpack.c.b16 %v421, %v413
    %v534 = vpack.c.b16 %v422, %v414
    %v535 = vpack.c.b16 %v423, %v415
    %v536 = vpack.c.b16 %v432, %v424
    %v537 = vpack.c.b16 %v433, %v425
    %v538 = vpack.c.b16 %v434, %v426
    %v539 = vpack.c.b16 %v435, %v427
    %v540 = vpack.c.b16 %v436, %v428
    %v541 = vpack.c.b16 %v437, %v429
    %v542 = vpack.c.b16 %v438, %v430
    %v543 = vpack.c.b16 %v439, %v431
    %v544 = vpack.c.b16 %v448, %v440
    %v545 = vpack.c.b16 %v449, %v441
    %v546 = vpack.c.b16 %v450, %v442
    %v547 = vpack.c.b16 %v451, %v443
    %v548 = vpack.c.b16 %v452, %v444
    %v549 = vpack.c.b16 %v453, %v445
    %v550 = vpack.c.b16 %v454, %v446
    %v551 = vpack.c.b16 %v455, %v447
    %v552 = vpack.c.b16 %v464, %v456
    %v553 = vpack.c.b16 %v465, %v457
    %v554 = vpack.c.b16 %v466, %v458
    %v555 = vpack.c.b16 %v467, %v459
    %v556 = vpack.c.b16 %v468, %v460
    %v557 = vpack.c.b16 %v469, %v461
    %v558 = vpack.c.b16 %v470, %v462
    %v559 = vpack.c.b16 %v471, %v463
    %v560 = vpack.c.b16 %v480, %v472
    %v561 = vpack.c.b16 %v481, %v473
    %v562 = vpack.c.b16 %v482, %v474
    %v563 = vpack.c.b16 %v483, %v475
    %v564 = vpack.c.b16 %v484, %v476
    %v565 = vpack.c.b16 %v485, %v477
    %v566 = vpack.c.b16 %v486, %v478
    %v567 = vpack.c.b16 %v487, %v479
    %v568 = vpack.c.b16 %v496, %v488
    %v569 = vpack.c.b16 %v497, %v489
    %v570 = vpack.c.b16 %v498, %v490
    %v571 = vpack.c.b16 %v499, %v491
    %v572 = vpack.c.b16 %v500, %v492
    %v573 = vpack.c.b16 %v501, %v493
    %v574 = vpack.c.b16 %v502, %v494
    %v575 = vpack.c.b16 %v503, %v495
    %v576 = vpack.c.b16 %v512, %v504
    %v577 = vpack.c.b16 %v513, %v505
    %v578 = vpack.c.b16 %v514, %v506
    %v579 = vpack.c.b16 %v515, %v507
    %v580 = vpack.c.b16 %v516, %v508
    %v581 = vpack.c.b16 %v517, %v509
    %v582 = vpack.c.b16 %v518, %v510
    %v583 = vpack.c.b16 %v519, %v511
    %648 = vmatpush.bf16.msra.mxu0 %v576
    %649 = vmatpush.bf16.msra.mxu0 %v568
    %650 = vmatpush.bf16.msra.mxu0 %v560
    %651 = vmatpush.bf16.msra.mxu0 %v552
    %652 = vmatpush.bf16.msra.mxu0 %v544
    %653 = vmatpush.bf16.msra.mxu0 %v536
    %654 = vmatpush.bf16.msra.mxu0 %v528
    %655 = vmatpush.bf16.msra.mxu0 %v520
    %656 = vmatmul.bf16.gmra.mxu0 %v244
    %v657 = vpop.f32.mrf.mxu0
    %v658 = vadd.f32 %v312, %v657
    %v659 = vpop.f32.mrf.mxu0
    %v660 = vadd.f32 %v312, %v659
    %661 = vmatmul.bf16.gmra.mxu0 %v245
    %v662 = vpop.f32.mrf.mxu0
    %v663 = vadd.f32 %v312, %v662
    %v664 = vpop.f32.mrf.mxu0
    %v665 = vadd.f32 %v312, %v664
    %666 = vdwg.mxu0
    %667 = vmatpush.bf16.msra.mxu0 %v577
    %668 = vmatpush.bf16.msra.mxu0 %v569
    %669 = vmatpush.bf16.msra.mxu0 %v561
    %670 = vmatpush.bf16.msra.mxu0 %v553
    %671 = vmatpush.bf16.msra.mxu0 %v545
    %672 = vmatpush.bf16.msra.mxu0 %v537
    %673 = vmatpush.bf16.msra.mxu0 %v529
    %674 = vmatpush.bf16.msra.mxu0 %v521
    %675 = vmatmul.bf16.gmra.mxu0 %v244
    %v676 = vpop.f32.mrf.mxu0
    %v677 = vadd.f32 %v313, %v676
    %v678 = vpop.f32.mrf.mxu0
    %v679 = vadd.f32 %v313, %v678
    %680 = vmatmul.bf16.gmra.mxu0 %v245
    %v681 = vpop.f32.mrf.mxu0
    %v682 = vadd.f32 %v313, %v681
    %v683 = vpop.f32.mrf.mxu0
    %v684 = vadd.f32 %v313, %v683
    %685 = vdwg.mxu0
    %686 = vmatpush.bf16.msra.mxu0 %v578
    %687 = vmatpush.bf16.msra.mxu0 %v570
    %688 = vmatpush.bf16.msra.mxu0 %v562
    %689 = vmatpush.bf16.msra.mxu0 %v554
    %690 = vmatpush.bf16.msra.mxu0 %v546
    %691 = vmatpush.bf16.msra.mxu0 %v538
    %692 = vmatpush.bf16.msra.mxu0 %v530
    %693 = vmatpush.bf16.msra.mxu0 %v522
    %694 = vmatmul.bf16.gmra.mxu0 %v244
    %v695 = vpop.f32.mrf.mxu0
    %v696 = vadd.f32 %v314, %v695
    %v697 = vpop.f32.mrf.mxu0
    %v698 = vadd.f32 %v314, %v697
    %699 = vmatmul.bf16.gmra.mxu0 %v245
    %v700 = vpop.f32.mrf.mxu0
    %v701 = vadd.f32 %v314, %v700
    %v702 = vpop.f32.mrf.mxu0
    %v703 = vadd.f32 %v314, %v702
    %704 = vdwg.mxu0
    %705 = vmatpush.bf16.msra.mxu0 %v579
    %706 = vmatpush.bf16.msra.mxu0 %v571
    %707 = vmatpush.bf16.msra.mxu0 %v563
    %708 = vmatpush.bf16.msra.mxu0 %v555
    %709 = vmatpush.bf16.msra.mxu0 %v547
    %710 = vmatpush.bf16.msra.mxu0 %v539
    %711 = vmatpush.bf16.msra.mxu0 %v531
    %712 = vmatpush.bf16.msra.mxu0 %v523
    %713 = vmatmul.bf16.gmra.mxu0 %v244
    %v714 = vpop.f32.mrf.mxu0
    %v715 = vadd.f32 %v315, %v714
    %v716 = vpop.f32.mrf.mxu0
    %v717 = vadd.f32 %v315, %v716
    %718 = vmatmul.bf16.gmra.mxu0 %v245
    %v719 = vpop.f32.mrf.mxu0
    %v720 = vadd.f32 %v315, %v719
    %v721 = vpop.f32.mrf.mxu0
    %v722 = vadd.f32 %v315, %v721
    %723 = vdwg.mxu0
    %724 = vmatpush.bf16.msra.mxu0 %v580
    %725 = vmatpush.bf16.msra.mxu0 %v572
    %726 = vmatpush.bf16.msra.mxu0 %v564
    %727 = vmatpush.bf16.msra.mxu0 %v556
    %728 = vmatpush.bf16.msra.mxu0 %v548
    %729 = vmatpush.bf16.msra.mxu0 %v540
    %730 = vmatpush.bf16.msra.mxu0 %v532
    %731 = vmatpush.bf16.msra.mxu0 %v524
    %732 = vmatmul.bf16.gmra.mxu0 %v244
    %v733 = vpop.f32.mrf.mxu0
    %v734 = vadd.f32 %v316, %v733
    %v735 = vpop.f32.mrf.mxu0
    %v736 = vadd.f32 %v316, %v735
    %737 = vmatmul.bf16.gmra.mxu0 %v245
    %v738 = vpop.f32.mrf.mxu0
    %v739 = vadd.f32 %v316, %v738
    %v740 = vpop.f32.mrf.mxu0
    %v741 = vadd.f32 %v316, %v740
    %742 = vdwg.mxu0
    %743 = vmatpush.bf16.msra.mxu0 %v581
    %744 = vmatpush.bf16.msra.mxu0 %v573
    %745 = vmatpush.bf16.msra.mxu0 %v565
    %746 = vmatpush.bf16.msra.mxu0 %v557
    %747 = vmatpush.bf16.msra.mxu0 %v549
    %748 = vmatpush.bf16.msra.mxu0 %v541
    %749 = vmatpush.bf16.msra.mxu0 %v533
    %750 = vmatpush.bf16.msra.mxu0 %v525
    %751 = vmatmul.bf16.gmra.mxu0 %v244
    %v752 = vpop.f32.mrf.mxu0
    %v753 = vadd.f32 %v317, %v752
    %v754 = vpop.f32.mrf.mxu0
    %v755 = vadd.f32 %v317, %v754
    %756 = vmatmul.bf16.gmra.mxu0 %v245
    %v757 = vpop.f32.mrf.mxu0
    %v758 = vadd.f32 %v317, %v757
    %v759 = vpop.f32.mrf.mxu0
    %v760 = vadd.f32 %v317, %v759
    %761 = vdwg.mxu0
    %762 = vmatpush.bf16.msra.mxu0 %v582
    %763 = vmatpush.bf16.msra.mxu0 %v574
    %764 = vmatpush.bf16.msra.mxu0 %v566
    %765 = vmatpush.bf16.msra.mxu0 %v558
    %766 = vmatpush.bf16.msra.mxu0 %v550
    %767 = vmatpush.bf16.msra.mxu0 %v542
    %768 = vmatpush.bf16.msra.mxu0 %v534
    %769 = vmatpush.bf16.msra.mxu0 %v526
    %770 = vmatmul.bf16.gmra.mxu0 %v244
    %v771 = vpop.f32.mrf.mxu0
    %v772 = vadd.f32 %v318, %v771
    %v773 = vpop.f32.mrf.mxu0
    %v774 = vadd.f32 %v318, %v773
    %775 = vmatmul.bf16.gmra.mxu0 %v245
    %v776 = vpop.f32.mrf.mxu0
    %v777 = vadd.f32 %v318, %v776
    %v778 = vpop.f32.mrf.mxu0
    %v779 = vadd.f32 %v318, %v778
    %780 = vdwg.mxu0
    %781 = vmatpush.bf16.msra.mxu0 %v583
    %782 = vmatpush.bf16.msra.mxu0 %v575
    %783 = vmatpush.bf16.msra.mxu0 %v567
    %784 = vmatpush.bf16.msra.mxu0 %v559
    %785 = vmatpush.bf16.msra.mxu0 %v551
    %786 = vmatpush.bf16.msra.mxu0 %v543
    %787 = vmatpush.bf16.msra.mxu0 %v535
    %788 = vmatpush.bf16.msra.mxu0 %v527
    %789 = vmatmul.bf16.gmra.mxu0 %v244
    %v790 = vpop.f32.mrf.mxu0
    %v791 = vadd.f32 %v319, %v790
    %v792 = vpop.f32.mrf.mxu0
    %v793 = vadd.f32 %v319, %v792
    %794 = vmatmul.bf16.gmra.mxu0 %v245
    %v795 = vpop.f32.mrf.mxu0
    %v796 = vadd.f32 %v319, %v795
    %v797 = vpop.f32.mrf.mxu0
    %v798 = vadd.f32 %v319, %v797
    %799 = vdwg.mxu0
    %v800 = vmax.f32 %v658, 0.0
    %v801 = vmax.f32 %v677, 0.0
    %v802 = vmax.f32 %v696, 0.0
    %v803 = vmax.f32 %v715, 0.0
    %v804 = vmax.f32 %v734, 0.0
    %v805 = vmax.f32 %v753, 0.0
    %v806 = vmax.f32 %v772, 0.0
    %v807 = vmax.f32 %v791, 0.0
    %v808 = vmax.f32 %v660, 0.0
    %v809 = vmax.f32 %v679, 0.0
    %v810 = vmax.f32 %v698, 0.0
    %v811 = vmax.f32 %v717, 0.0
    %v812 = vmax.f32 %v736, 0.0
    %v813 = vmax.f32 %v755, 0.0
    %v814 = vmax.f32 %v774, 0.0
    %v815 = vmax.f32 %v793, 0.0
    %v816 = vmax.f32 %v663, 0.0
    %v817 = vmax.f32 %v682, 0.0
    %v818 = vmax.f32 %v701, 0.0
    %v819 = vmax.f32 %v720, 0.0
    %v820 = vmax.f32 %v739, 0.0
    %v821 = vmax.f32 %v758, 0.0
    %v822 = vmax.f32 %v777, 0.0
    %v823 = vmax.f32 %v796, 0.0
    %v824 = vmax.f32 %v665, 0.0
    %v825 = vmax.f32 %v684, 0.0
    %v826 = vmax.f32 %v703, 0.0
    %v827 = vmax.f32 %v722, 0.0
    %v828 = vmax.f32 %v741, 0.0
    %v829 = vmax.f32 %v760, 0.0
    %v830 = vmax.f32 %v779, 0.0
    %v831 = vmax.f32 %v798, 0.0
    %v832 = vmax.f32 %v800, %v808
    %v833 = vrot.slane %v832, 4
    %v834 = vmax.f32 %v832, %v833
    %v835 = vrot.slane %v834, 2
    %v836 = vmax.f32 %v834, %v835
    %v837 = vrot.slane %v836, 1
    %v838 = vmax.f32 %v836, %v837
    %v839 = vmax.f32 %v801, %v809
    %v840 = vrot.slane %v839, 4
    %v841 = vmax.f32 %v839, %v840
    %v842 = vrot.slane %v841, 2
    %v843 = vmax.f32 %v841, %v842
    %v844 = vrot.slane %v843, 1
    %v845 = vmax.f32 %v843, %v844
    %v846 = vmax.f32 %v802, %v810
    %v847 = vrot.slane %v846, 4
    %v848 = vmax.f32 %v846, %v847
    %v849 = vrot.slane %v848, 2
    %v850 = vmax.f32 %v848, %v849
    %v851 = vrot.slane %v850, 1
    %v852 = vmax.f32 %v850, %v851
    %v853 = vmax.f32 %v803, %v811
    %v854 = vrot.slane %v853, 4
    %v855 = vmax.f32 %v853, %v854
    %v856 = vrot.slane %v855, 2
    %v857 = vmax.f32 %v855, %v856
    %v858 = vrot.slane %v857, 1
    %v859 = vmax.f32 %v857, %v858
    %v860 = vmax.f32 %v804, %v812
    %v861 = vrot.slane %v860, 4
    %v862 = vmax.f32 %v860, %v861
    %v863 = vrot.slane %v862, 2
    %v864 = vmax.f32 %v862, %v863
    %v865 = vrot.slane %v864, 1
    %v866 = vmax.f32 %v864, %v865
    %v867 = vmax.f32 %v805, %v813
    %v868 = vrot.slane %v867, 4
    %v869 = vmax.f32 %v867, %v868
    %v870 = vrot.slane %v869, 2
    %v871 = vmax.f32 %v869, %v870
    %v872 = vrot.slane %v871, 1
    %v873 = vmax.f32 %v871, %v872
    %v874 = vmax.f32 %v806, %v814
    %v875 = vrot.slane %v874, 4
    %v876 = vmax.f32 %v874, %v875
    %v877 = vrot.slane %v876, 2
    %v878 = vmax.f32 %v876, %v877
    %v879 = vrot.slane %v878, 1
    %v880 = vmax.f32 %v878, %v879
    %v881 = vmax.f32 %v807, %v815
    %v882 = vrot.slane %v881, 4
    %v883 = vmax.f32 %v881, %v882
    %v884 = vrot.slane %v883, 2
    %v885 = vmax.f32 %v883, %v884
    %v886 = vrot.slane %v885, 1
    %v887 = vmax.f32 %v885, %v886
    %v888 = vmax.f32 %v816, %v824
    %v889 = vrot.slane %v888, 4
    %v890 = vmax.f32 %v888, %v889
    %v891 = vrot.slane %v890, 2
    %v892 = vmax.f32 %v890, %v891
    %v893 = vrot.slane %v892, 1
    %v894 = vmax.f32 %v892, %v893
    %v895 = vmax.f32 %v817, %v825
    %v896 = vrot.slane %v895, 4
    %v897 = vmax.f32 %v895, %v896
    %v898 = vrot.slane %v897, 2
    %v899 = vmax.f32 %v897, %v898
    %v900 = vrot.slane %v899, 1
    %v901 = vmax.f32 %v899, %v900
    %v902 = vmax.f32 %v818, %v826
    %v903 = vrot.slane %v902, 4
    %v904 = vmax.f32 %v902, %v903
    %v905 = vrot.slane %v904, 2
    %v906 = vmax.f32 %v904, %v905
    %v907 = vrot.slane %v906, 1
    %v908 = vmax.f32 %v906, %v907
    %v909 = vmax.f32 %v819, %v827
    %v910 = vrot.slane %v909, 4
    %v911 = vmax.f32 %v909, %v910
    %v912 = vrot.slane %v911, 2
    %v913 = vmax.f32 %v911, %v912
    %v914 = vrot.slane %v913, 1
    %v915 = vmax.f32 %v913, %v914
    %v916 = vmax.f32 %v820, %v828
    %v917 = vrot.slane %v916, 4
    %v918 = vmax.f32 %v916, %v917
    %v919 = vrot.slane %v918, 2
    %v920 = vmax.f32 %v918, %v919
    %v921 = vrot.slane %v920, 1
    %v922 = vmax.f32 %v920, %v921
    %v923 = vmax.f32 %v821, %v829
    %v924 = vrot.slane %v923, 4
    %v925 = vmax.f32 %v923, %v924
    %v926 = vrot.slane %v925, 2
    %v927 = vmax.f32 %v925, %v926
    %v928 = vrot.slane %v927, 1
    %v929 = vmax.f32 %v927, %v928
    %v930 = vmax.f32 %v822, %v830
    %v931 = vrot.slane %v930, 4
    %v932 = vmax.f32 %v930, %v931
    %v933 = vrot.slane %v932, 2
    %v934 = vmax.f32 %v932, %v933
    %v935 = vrot.slane %v934, 1
    %v936 = vmax.f32 %v934, %v935
    %v937 = vmax.f32 %v823, %v831
    %v938 = vrot.slane %v937, 4
    %v939 = vmax.f32 %v937, %v938
    %v940 = vrot.slane %v939, 2
    %v941 = vmax.f32 %v939, %v940
    %v942 = vrot.slane %v941, 1
    %v943 = vmax.f32 %v941, %v942
    %v944 = vld [vmem:[#allocation7] sm:$0xff]
    %v945 = vld [vmem:[#allocation7 + $0x8] sm:$0xff]
    %v962 = vrot.slane %v845, 6
    %v963 = vrot.slane %v852, 4
    %v964 = vrot.slane %v859, 2
    %v965 = vrot.slane %v873, 6
    %v966 = vrot.slane %v880, 4
    %v967 = vrot.slane %v887, 2
    %v968 = vrot.slane %v901, 6
    %v969 = vrot.slane %v908, 4
    %v970 = vrot.slane %v915, 2
    %v971 = vrot.slane %v929, 6
    %v972 = vrot.slane %v936, 4
    %v973 = vrot.slane %v943, 2
    %v974 = vsel %vm147, %v838, %v962
    %vm975 = vcmask 1045508
    %v976 = vsel %vm975, %v963, %v964
    %vm977 = vcmask 1043456
    %v978 = vsel %vm977, %v974, %v976
    %v979 = vsel %vm147, %v866, %v965
    %v980 = vsel %vm975, %v966, %v967
    %v981 = vsel %vm977, %v979, %v980
    %v982 = vsel %vm147, %v894, %v968
    %v983 = vsel %vm975, %v969, %v970
    %v984 = vsel %vm977, %v982, %v983
    %v985 = vsel %vm147, %v922, %v971
    %v986 = vsel %vm975, %v972, %v973
    %v987 = vsel %vm977, %v985, %v986
    %vm988 = vcmask 1044484
    %v989 = vsel %vm988, %v978, %v978
    %vm990 = vcmask 1046534
    %v991 = vsel %vm990, %v978, %v989
    %v992 = vrot.slane %v984, 7
    %vm993 = vcmask 1041409
    %v994 = vsel %vm993, %v992, %v991
    %vm995 = vcmask 1043459
    %v996 = vsel %vm995, %v992, %v994
    %vm997 = vcmask 1045509
    %v998 = vsel %vm997, %v992, %v996
    %vm999 = vcmask 1047559
    %v1000 = vsel %vm999, %v992, %v998
    %v1001 = vsel %vm988, %v981, %v981
    %v1002 = vsel %vm990, %v981, %v1001
    %v1003 = vrot.slane %v987, 7
    %v1004 = vsel %vm993, %v1003, %v1002
    %v1005 = vsel %vm995, %v1003, %v1004
    %v1006 = vsel %vm997, %v1003, %v1005
    %v1007 = vsel %vm999, %v1003, %v1006
    %v1010 = vmax.f32 %v944, %v1000
    %v1011 = vmax.f32 %v945, %v1007
    %1012 = vst [vmem:[#allocation7] sm:$0xff] %v1010
    %1013 = vst [vmem:[#allocation7 + $0x8] sm:$0xff] %v1011
    // Predicated region
    $region42: #{tpu_custom_call.1} parent=1 // pred_check
      _
    $region43: #{tpu_custom_call.1} parent=1 // pred_check_branch
      %1015 = sbr.rel (0) target = $region45
    $region44: #{tpu_custom_call.1} parent=1 // pred_region
      %1017 = vsyncadd [#allocation4], 0
      %s1019 = sshll.u32 [#allocation7], 4
      %s1020 = int_to_ptr.vmem [resolvable:$true] %s1019
      %s1021 = sshll.u32 %s7, 4
      %s1022 = int_to_ptr.hbm [resolvable:$true] %s1021
      %1024 = dma.vmem_to_hbm [thread:$0]  %s1020, 256, %s1022, [#allocation4]
    $region45: #{tpu_custom_call.1} parent=1 // pred_fallthru
      _
    // Predicated region
    $region46: #{tpu_custom_call.1} parent=1 // pred_check
      _
    $region47: #{tpu_custom_call.1} parent=1 // pred_check_branch
      %1026 = sbr.rel (0) target = $region49
    $region48: #{tpu_custom_call.1} parent=1 // pred_region
      %1028 = dma.done [#allocation4], 256
    $region49: #{tpu_custom_call.1} parent=1 // pred_fallthru
      _
    %1029 = vsyncpa [#allocation3], 1
    %1030 = vsyncpa [#allocation6], 1
    %1031 = vsyncpa [#allocation4], 1

</llo_original>
